<compile_context>
chip_gen: v7x
topology: tpu7x:2x2x1
jax: 0.10.0
libtpu: 0.0.40
codegen_flags: <defaults>
</compile_context>

<pallas_src>
import jax
import jax.numpy as jnp
from jax.experimental import pallas as pl
from jax.experimental.pallas import tpu as pltpu


def _round_up(x, m):
    return ((x + m - 1) // m) * m


def _pad_to(a, shape):
    pads = [(0, t - s) for s, t in zip(a.shape, shape)]
    return jnp.pad(a, pads)


def _vmem_limit_bytes():
    # Use most of the device's VMEM (the old hard-coded 32 MiB left ~3/4 of
    # v5e/v6e's 128 MiB unused).  Falls back to a v7x-safe budget.
    try:
        cap = pltpu.get_tpu_info().vmem_capacity_bytes
    except Exception:
        cap = 64 * 1024 * 1024
    return int(cap) * 7 // 8


def _estimate_vmem_bytes(Bc, Tc, Hp, V):
    """Rough double-buffered VMEM footprint of one grid step (bytes)."""
    f32 = 4
    vp = _round_up(V, 128)                              # lane padding in VMEM
    total = 0
    total += 2 * Bc * _round_up(Tc, 8) * 128 * f32      # token-id block (i32)
    total += 2 * Bc * Hp * f32                          # h0 block
    total += 2 * _round_up(V, 8) * Hp * f32             # folded table
    total += 2 * Hp * Hp * f32                          # W_hh^T
    total += 2 * Hp * vp * f32                          # W_fc^T
    total += 2 * 8 * vp * f32                           # b_fc
    total += 2 * Bc * Tc * vp * f32                     # logits out block
    total += 2 * Bc * Hp * f32                          # h_out block
    total += Bc * Tc * Hp * f32                         # work scratch
    total += Bc * Hp * f32                              # h_carry scratch
    return total


def _pick_chunks(B, T, Hp, V, budget_bytes):
    """Pick (Bc, Tc): biggest batch chunk first (MXU sublane utilisation of
    the serial recurrence is the main lever), then the biggest time chunk that
    still fits the VMEM budget."""
    if T % 8 == 0:
        t_cands = [c for c in (64, 32, 16, 8) if T % c == 0] or [T]
    else:
        t_cands = [T]
    if B % 8 == 0:
        b_cands = [c for c in range(min(B, 256), 7, -8) if B % c == 0] or [B]
    else:
        b_cands = [B]
    for bc in b_cands:
        for tc in t_cands:
            if _estimate_vmem_bytes(bc, tc, Hp, V) <= budget_bytes:
                return bc, tc
    return b_cands[-1], t_cands[-1]


def char_rnn_kernel(tok_ref,     # (Bc, Tc, 1)  int32 token ids
                    h0_ref,      # (Bc, Hp)     f32 initial hidden state
                    table_ref,   # (V,  Hp)     f32 folded table: emb@W_ih^T + b_ih + b_hh
                    w_hh_ref,    # (Hp, Hp)     f32 W_hh^T (zero-padded)
                    w_fc_ref,    # (Hp, V)      f32/bf16 W_fc^T (rows zero-padded)
                    b_fc_ref,    # (1,  V)      f32
                    logits_ref,  # (Bc, Tc, V)  f32 output chunk
                    h_out_ref,   # (Bc, Hp)     f32 final hidden state
                    h_carry,     # VMEM (Bc, Hp)     h carried across time chunks
                    work):       # VMEM (Bc, Tc, Hp) staged inputs / hidden states
    Bc, Tc, _ = tok_ref.shape
    V, Hp = table_ref.shape
    t_idx = pl.program_id(1)

    # NOTE: the recurrence relies on the time axis being the innermost,
    # sequentially iterated ("arbitrary") grid axis; h_carry is re-seeded at
    # the start of each batch chunk's time loop.
    @pl.when(t_idx == 0)
    def _():
        h_carry[...] = h0_ref[...]

    # ---- In-kernel embedding gather.  The table already holds the folded
    # input projection + biases; the gather is a one-hot MXU matmul (exact,
    # lowers everywhere).  HBM input per chunk is just Bc*Tc token ids. -------
    tok = tok_ref[...]                                         # (Bc, Tc, 1)
    vocab_ids = jax.lax.broadcasted_iota(jnp.int32, (Bc, Tc, V), 2)
    onehot = (vocab_ids == tok).astype(jnp.float32).reshape(Bc * Tc, V)
    x_proj = jnp.dot(onehot, table_ref[...],
                     preferred_element_type=jnp.float32)       # (Bc*Tc, Hp)
    work[...] = x_proj.reshape(Bc, Tc, Hp)                     # stage in VMEM

    # ---- Serial recurrence: only the (Bc,Hp)@(Hp,Hp) matmul + tanh are on
    # the critical path; h lives in vregs.  Each step reads its staged input
    # slot and overwrites it with the hidden state (halves scratch). ----------
    w_hh = w_hh_ref[...]
    h = h_carry[...]
    for t in range(Tc):                                        # fully unrolled
        h = jnp.tanh(work[:, t, :]
                     + jnp.dot(h, w_hh, preferred_element_type=jnp.float32))
        work[:, t, :] = h
    h_carry[...] = h

    # Only the last time chunk's hidden state matters -> single guarded store.
    @pl.when(t_idx == pl.num_programs(1) - 1)
    def _():
        h_out_ref[...] = h_carry[...]

    # ---- Deferred output projection: one batched matmul per chunk, stored at
    # the true vocab width (no wrapper-side de-padding HBM pass). ------------
    hh = work[...].reshape(Bc * Tc, Hp).astype(w_fc_ref.dtype)
    logits = (jnp.dot(hh, w_fc_ref[...], preferred_element_type=jnp.float32)
              + b_fc_ref[...])
    logits_ref[...] = logits.reshape(Bc, Tc, V)


def char_rnn_forward(tokens, params, h=None, *, fc_dtype=jnp.float32):
    """tokens: (B, T) int32. Returns (logits (B,T,V) f32, h (1,B,H) f32)."""
    B, T = tokens.shape
    V, H = params["fc_w"].shape
    Hp = _round_up(H, 128)

    hi = jax.lax.Precision.HIGHEST
    # Fold the input projection and both biases into the embedding table once:
    # table[tok] == emb[tok] @ W_ih^T + b_ih + b_hh.  One (V,H)@(H,H) matmul
    # on the host graph instead of one (Bc*Tc,Hp)@(Hp,Hp) matmul per chunk.
    table = (jnp.dot(params["embedding"], params["rnn_w_ih"].T, precision=hi)
             + params["rnn_b_ih"] + params["rnn_b_hh"])               # (V, H)
    table_p = _pad_to(table.astype(jnp.float32), (V, Hp))
    w_hh_t = _pad_to(params["rnn_w_hh"].T.astype(jnp.float32), (Hp, Hp))
    w_fc_t = _pad_to(params["fc_w"].T.astype(jnp.float32), (Hp, V)).astype(fc_dtype)
    b_fc = params["fc_b"].reshape(1, V).astype(jnp.float32)

    if h is None:
        h0 = jnp.zeros((B, Hp), jnp.float32)
    else:
        h0 = _pad_to(h[0].astype(jnp.float32), (B, Hp))

    budget = _vmem_limit_bytes()
    Bc, Tc = _pick_chunks(B, T, Hp, V, budget)
    grid = (B // Bc, T // Tc)

    tok3 = tokens.astype(jnp.int32).reshape(B, T, 1)

    logits, h_out = pl.pallas_call(
        char_rnn_kernel,
        out_shape=(jax.ShapeDtypeStruct((B, T, V), jnp.float32),
                   jax.ShapeDtypeStruct((B, Hp), jnp.float32)),
        grid=grid,
        in_specs=[
            pl.BlockSpec((Bc, Tc, 1), lambda b, t: (b, t, 0)),    # token ids
            pl.BlockSpec((Bc, Hp), lambda b, t: (b, 0)),          # h0
            # Grid-invariant weights: constant index_map => fetched once and
            # kept VMEM-resident across grid steps.  (pl.Buffered(1) on these
            # would additionally drop the second pipeline buffer — the lever
            # to pull first if VMEM gets tight on v7x's 64 MiB.)
            pl.BlockSpec((V, Hp), lambda b, t: (0, 0)),           # folded table
            pl.BlockSpec((Hp, Hp), lambda b, t: (0, 0)),          # W_hh^T
            pl.BlockSpec((Hp, V), lambda b, t: (0, 0)),           # W_fc^T
            pl.BlockSpec((1, V), lambda b, t: (0, 0)),            # b_fc
        ],
        out_specs=(
            pl.BlockSpec((Bc, Tc, V), lambda b, t: (b, t, 0)),    # logits chunk
            pl.BlockSpec((Bc, Hp), lambda b, t: (b, 0)),          # final hidden
        ),
        scratch_shapes=[
            pltpu.VMEM((Bc, Hp), jnp.float32),       # h carried across T chunks
            pltpu.VMEM((Bc, Tc, Hp), jnp.float32),   # staged inputs / hiddens
        ],
        compiler_params=pltpu.CompilerParams(
            dimension_semantics=("parallel", "arbitrary"),
            vmem_limit_bytes=budget),
    )(tok3, h0, table_p, w_hh_t, w_fc_t, b_fc)

    return logits, h_out[:, :H][None]                # h: (1, B, H)


def _reference_forward(tokens, params, h=None):
    """Pure-JAX reference mirroring the PyTorch module (correctness check)."""
    B, T = tokens.shape
    V, H = params["fc_w"].shape
    hi = jax.lax.Precision.HIGHEST
    if h is None:
        h = jnp.zeros((1, B, H), jnp.float32)
    x = params["embedding"][tokens]                  # (B, T, H)
    h_t = h[0]
    outs = []
    for t in range(T):
        h_t = jnp.tanh(jnp.dot(x[:, t, :], params["rnn_w_ih"].T, precision=hi)
                       + params["rnn_b_ih"]
                       + jnp.dot(h_t, params["rnn_w_hh"].T, precision=hi)
                       + params["rnn_b_hh"])
        outs.append(h_t)
    out = jnp.stack(outs, axis=1)                    # (B, T, H)
    logits = jnp.dot(out, params["fc_w"].T, precision=hi) + params["fc_b"]
    return logits, h_t[None]


def init_params(key, vocab_size, hidden_size):
    ks = jax.random.split(key, 7)
    s = 1.0 / jnp.sqrt(hidden_size)
    return {
        "embedding": jax.random.normal(ks[0], (vocab_size, hidden_size), jnp.float32),
        "rnn_w_ih": jax.random.uniform(ks[1], (hidden_size, hidden_size), jnp.float32, -s, s),
        "rnn_w_hh": jax.random.uniform(ks[2], (hidden_size, hidden_size), jnp.float32, -s, s),
        "rnn_b_ih": jax.random.uniform(ks[3], (hidden_size,), jnp.float32, -s, s),
        "rnn_b_hh": jax.random.uniform(ks[4], (hidden_size,), jnp.float32, -s, s),
        "fc_w": jax.random.uniform(ks[5], (vocab_size, hidden_size), jnp.float32, -s, s),
        "fc_b": jax.random.uniform(ks[6], (vocab_size,), jnp.float32, -s, s),
    }


if __name__ == "__main__":
    VOCAB, HIDDEN, B, T = 16, 32, 2, 8
    key = jax.random.PRNGKey(0)
    k_params, k_tokens = jax.random.split(key)
    params = init_params(k_params, VOCAB, HIDDEN)
    tokens = jax.random.randint(k_tokens, (B, T), 0, VOCAB, dtype=jnp.int32)

    logits, h = char_rnn_forward(tokens, params)
    jax.block_until_ready((logits, h))

    ref_logits, ref_h = _reference_forward(tokens, params)
    assert logits.shape == (B, T, VOCAB) and h.shape == (1, B, HIDDEN)
    assert jnp.allclose(logits, ref_logits, atol=1e-3, rtol=1e-3), \
        float(jnp.max(jnp.abs(logits - ref_logits)))
    assert jnp.allclose(h, ref_h, atol=1e-3, rtol=1e-3)

    # bf16 fc-projection path (MXU throughput lever on all generations); the
    # recurrence and gather stay f32, so the hidden state is unchanged.
    logits_bf16, h_bf16 = char_rnn_forward(tokens, params, fc_dtype=jnp.bfloat16)
    jax.block_until_ready((logits_bf16, h_bf16))
    assert jnp.allclose(logits_bf16, ref_logits, atol=5e-2, rtol=5e-2)
    assert jnp.allclose(h_bf16, ref_h, atol=1e-3, rtol=1e-3)

    print("KERNEL_OK")
</pallas_src>

<mosaic_0001>
module attributes {stable_mosaic.version = 11 : i64} {
  func.func @char_rnn_kernel(%arg0: i32, %arg1: i32, %arg2: memref<2x8x1xi32, #tpu.memory_space<vmem>>, %arg3: memref<2x128xf32, #tpu.memory_space<vmem>>, %arg4: memref<16x128xf32, #tpu.memory_space<vmem>>, %arg5: memref<128x128xf32, #tpu.memory_space<vmem>>, %arg6: memref<128x16xf32, #tpu.memory_space<vmem>>, %arg7: memref<1x16xf32, #tpu.memory_space<vmem>>, %arg8: memref<2x8x16xf32, #tpu.memory_space<vmem>>, %arg9: memref<2x128xf32, #tpu.memory_space<vmem>>, %arg10: memref<2x128xf32, #tpu.memory_space<vmem>>, %arg11: memref<2x8x128xf32, #tpu.memory_space<vmem>>) attributes {dimension_semantics = [#tpu.dimension_semantics<parallel>, #tpu.dimension_semantics<arbitrary>], iteration_bounds = array<i64: 1, 1>, scalar_prefetch = 0 : i64, scratch_operands = 2 : i64, tpu.core_type = #tpu.core_type<tc>, window_params = [{transform_indices = @transform_0, window_bounds = array<i64: 2, 8, 1>}, {transform_indices = @transform_1, window_bounds = array<i64: 2, 128>}, {pipeline_mode = #tpu.pipeline_mode<synchronous>, transform_indices = @transform_2, window_bounds = array<i64: 16, 128>}, {pipeline_mode = #tpu.pipeline_mode<synchronous>, transform_indices = @transform_3, window_bounds = array<i64: 128, 128>}, {pipeline_mode = #tpu.pipeline_mode<synchronous>, transform_indices = @transform_4, window_bounds = array<i64: 128, 16>}, {pipeline_mode = #tpu.pipeline_mode<synchronous>, transform_indices = @transform_5, window_bounds = array<i64: 1, 16>}, {transform_indices = @transform_6, window_bounds = array<i64: 2, 8, 16>}, {transform_indices = @transform_7, window_bounds = array<i64: 2, 128>}]} {
    %c0_i32 = arith.constant 0 : i32
    %0 = arith.cmpi eq, %arg1, %c0_i32 : i32
    %1 = arith.extui %0 : i1 to i32
    %c0_i32_0 = arith.constant 0 : i32
    %2 = arith.cmpi ne, %1, %c0_i32_0 : i32
    scf.if %2 {
      %c0_76 = arith.constant 0 : index
      %c0_77 = arith.constant 0 : index
      %93 = vector.load %arg3[%c0_76, %c0_77] : memref<2x128xf32, #tpu.memory_space<vmem>>, vector<2x128xf32>
      %c0_78 = arith.constant 0 : index
      %c0_79 = arith.constant 0 : index
      %94 = vector.load %arg10[%c0_78, %c0_79] : memref<2x128xf32, #tpu.memory_space<vmem>>, vector<2x128xf32>
      tpu.vector_store %arg10[%c0_78, %c0_79], %93 {strides = array<i32>} : memref<2x128xf32, #tpu.memory_space<vmem>>, vector<2x128xf32>,
    } else {
    }
    %c0 = arith.constant 0 : index
    %c0_1 = arith.constant 0 : index
    %c0_2 = arith.constant 0 : index
    %3 = vector.load %arg2[%c0, %c0_1, %c0_2] : memref<2x8x1xi32, #tpu.memory_space<vmem>>, vector<2x8x1xi32>
    %4 = tpu.iota {dimensions = array<i32: 2>} : vector<2x8x16xi32>
    %5 = vector.broadcast %3 : vector<2x8x1xi32> to vector<2x8x16xi32>
    %6 = arith.cmpi eq, %4, %5 : vector<2x8x16xi32>
    %7 = arith.extui %6 : vector<2x8x16xi1> to vector<2x8x16xi32>
    %8 = arith.sitofp %7 : vector<2x8x16xi32> to vector<2x8x16xf32>
    %9 = vector.shape_cast %8 : vector<2x8x16xf32> to vector<16x16xf32>
    %c0_3 = arith.constant 0 : index
    %c0_4 = arith.constant 0 : index
    %10 = vector.load %arg4[%c0_3, %c0_4] : memref<16x128xf32, #tpu.memory_space<vmem>>, vector<16x128xf32>
    %cst = arith.constant dense<0.000000e+00> : vector<16x128xf32>
    %11 = tpu.matmul %9, %10, %cst {dimension_numbers = #tpu.dot_dimension_numbers<[1], [0], [0], [1], [0, 0, 1, 1], [], []>} : vector<16x16xf32>, vector<16x128xf32>, vector<16x128xf32> -> vector<16x128xf32>
    %12 = vector.shape_cast %11 : vector<16x128xf32> to vector<2x8x128xf32>
    %c0_5 = arith.constant 0 : index
    %c0_6 = arith.constant 0 : index
    %c0_7 = arith.constant 0 : index
    %13 = vector.load %arg11[%c0_5, %c0_6, %c0_7] : memref<2x8x128xf32, #tpu.memory_space<vmem>>, vector<2x8x128xf32>
    tpu.vector_store %arg11[%c0_5, %c0_6, %c0_7], %12 {strides = array<i32>} : memref<2x8x128xf32, #tpu.memory_space<vmem>>, vector<2x8x128xf32>,
    %c0_8 = arith.constant 0 : index
    %c0_9 = arith.constant 0 : index
    %14 = vector.load %arg5[%c0_8, %c0_9] : memref<128x128xf32, #tpu.memory_space<vmem>>, vector<128x128xf32>
    %c0_10 = arith.constant 0 : index
    %c0_11 = arith.constant 0 : index
    %15 = vector.load %arg10[%c0_10, %c0_11] : memref<2x128xf32, #tpu.memory_space<vmem>>, vector<2x128xf32>
    %c0_12 = arith.constant 0 : index
    %c0_13 = arith.constant 0 : index
    %c0_14 = arith.constant 0 : index
    %16 = vector.load %arg11[%c0_12, %c0_13, %c0_14] : memref<2x8x128xf32, #tpu.memory_space<vmem>>, vector<2x1x128xf32>
    %17 = vector.shape_cast %16 : vector<2x1x128xf32> to vector<2x128xf32>
    %cst_15 = arith.constant dense<0.000000e+00> : vector<2x128xf32>
    %18 = tpu.matmul %15, %14, %cst_15 {dimension_numbers = #tpu.dot_dimension_numbers<[1], [0], [0], [1], [0, 0, 1, 1], [], []>} : vector<2x128xf32>, vector<128x128xf32>, vector<2x128xf32> -> vector<2x128xf32>
    %19 = arith.addf %17, %18 : vector<2x128xf32>
    %20 = math.tanh %19 : vector<2x128xf32>
    %c0_16 = arith.constant 0 : index
    %c0_17 = arith.constant 0 : index
    %c0_18 = arith.constant 0 : index
    %21 = vector.load %arg11[%c0_16, %c0_17, %c0_18] : memref<2x8x128xf32, #tpu.memory_space<vmem>>, vector<2x1x128xf32>
    %22 = vector.shape_cast %21 : vector<2x1x128xf32> to vector<2x128xf32>
    %23 = vector.shape_cast %20 : vector<2x128xf32> to vector<2x1x128xf32>
    tpu.vector_store %arg11[%c0_16, %c0_17, %c0_18], %23 {strides = array<i32>} : memref<2x8x128xf32, #tpu.memory_space<vmem>>, vector<2x1x128xf32>,
    %c0_19 = arith.constant 0 : index
    %c1 = arith.constant 1 : index
    %c0_20 = arith.constant 0 : index
    %24 = vector.load %arg11[%c0_19, %c1, %c0_20] : memref<2x8x128xf32, #tpu.memory_space<vmem>>, vector<2x1x128xf32>
    %25 = vector.shape_cast %24 : vector<2x1x128xf32> to vector<2x128xf32>
    %cst_21 = arith.constant dense<0.000000e+00> : vector<2x128xf32>
    %26 = tpu.matmul %20, %14, %cst_21 {dimension_numbers = #tpu.dot_dimension_numbers<[1], [0], [0], [1], [0, 0, 1, 1], [], []>} : vector<2x128xf32>, vector<128x128xf32>, vector<2x128xf32> -> vector<2x128xf32>
    %27 = arith.addf %25, %26 : vector<2x128xf32>
    %28 = math.tanh %27 : vector<2x128xf32>
    %c0_22 = arith.constant 0 : index
    %c1_23 = arith.constant 1 : index
    %c0_24 = arith.constant 0 : index
    %29 = vector.load %arg11[%c0_22, %c1_23, %c0_24] : memref<2x8x128xf32, #tpu.memory_space<vmem>>, vector<2x1x128xf32>
    %30 = vector.shape_cast %29 : vector<2x1x128xf32> to vector<2x128xf32>
    %31 = vector.shape_cast %28 : vector<2x128xf32> to vector<2x1x128xf32>
    tpu.vector_store %arg11[%c0_22, %c1_23, %c0_24], %31 {strides = array<i32>} : memref<2x8x128xf32, #tpu.memory_space<vmem>>, vector<2x1x128xf32>,
    %c0_25 = arith.constant 0 : index
    %c2 = arith.constant 2 : index
    %c0_26 = arith.constant 0 : index
    %32 = vector.load %arg11[%c0_25, %c2, %c0_26] : memref<2x8x128xf32, #tpu.memory_space<vmem>>, vector<2x1x128xf32>
    %33 = vector.shape_cast %32 : vector<2x1x128xf32> to vector<2x128xf32>
    %cst_27 = arith.constant dense<0.000000e+00> : vector<2x128xf32>
    %34 = tpu.matmul %28, %14, %cst_27 {dimension_numbers = #tpu.dot_dimension_numbers<[1], [0], [0], [1], [0, 0, 1, 1], [], []>} : vector<2x128xf32>, vector<128x128xf32>, vector<2x128xf32> -> vector<2x128xf32>
    %35 = arith.addf %33, %34 : vector<2x128xf32>
    %36 = math.tanh %35 : vector<2x128xf32>
    %c0_28 = arith.constant 0 : index
    %c2_29 = arith.constant 2 : index
    %c0_30 = arith.constant 0 : index
    %37 = vector.load %arg11[%c0_28, %c2_29, %c0_30] : memref<2x8x128xf32, #tpu.memory_space<vmem>>, vector<2x1x128xf32>
    %38 = vector.shape_cast %37 : vector<2x1x128xf32> to vector<2x128xf32>
    %39 = vector.shape_cast %36 : vector<2x128xf32> to vector<2x1x128xf32>
    tpu.vector_store %arg11[%c0_28, %c2_29, %c0_30], %39 {strides = array<i32>} : memref<2x8x128xf32, #tpu.memory_space<vmem>>, vector<2x1x128xf32>,
    %c0_31 = arith.constant 0 : index
    %c3 = arith.constant 3 : index
    %c0_32 = arith.constant 0 : index
    %40 = vector.load %arg11[%c0_31, %c3, %c0_32] : memref<2x8x128xf32, #tpu.memory_space<vmem>>, vector<2x1x128xf32>
    %41 = vector.shape_cast %40 : vector<2x1x128xf32> to vector<2x128xf32>
    %cst_33 = arith.constant dense<0.000000e+00> : vector<2x128xf32>
    %42 = tpu.matmul %36, %14, %cst_33 {dimension_numbers = #tpu.dot_dimension_numbers<[1], [0], [0], [1], [0, 0, 1, 1], [], []>} : vector<2x128xf32>, vector<128x128xf32>, vector<2x128xf32> -> vector<2x128xf32>
    %43 = arith.addf %41, %42 : vector<2x128xf32>
    %44 = math.tanh %43 : vector<2x128xf32>
    %c0_34 = arith.constant 0 : index
    %c3_35 = arith.constant 3 : index
    %c0_36 = arith.constant 0 : index
    %45 = vector.load %arg11[%c0_34, %c3_35, %c0_36] : memref<2x8x128xf32, #tpu.memory_space<vmem>>, vector<2x1x128xf32>
    %46 = vector.shape_cast %45 : vector<2x1x128xf32> to vector<2x128xf32>
    %47 = vector.shape_cast %44 : vector<2x128xf32> to vector<2x1x128xf32>
    tpu.vector_store %arg11[%c0_34, %c3_35, %c0_36], %47 {strides = array<i32>} : memref<2x8x128xf32, #tpu.memory_space<vmem>>, vector<2x1x128xf32>,
    %c0_37 = arith.constant 0 : index
    %c4 = arith.constant 4 : index
    %c0_38 = arith.constant 0 : index
    %48 = vector.load %arg11[%c0_37, %c4, %c0_38] : memref<2x8x128xf32, #tpu.memory_space<vmem>>, vector<2x1x128xf32>
    %49 = vector.shape_cast %48 : vector<2x1x128xf32> to vector<2x128xf32>
    %cst_39 = arith.constant dense<0.000000e+00> : vector<2x128xf32>
    %50 = tpu.matmul %44, %14, %cst_39 {dimension_numbers = #tpu.dot_dimension_numbers<[1], [0], [0], [1], [0, 0, 1, 1], [], []>} : vector<2x128xf32>, vector<128x128xf32>, vector<2x128xf32> -> vector<2x128xf32>
    %51 = arith.addf %49, %50 : vector<2x128xf32>
    %52 = math.tanh %51 : vector<2x128xf32>
    %c0_40 = arith.constant 0 : index
    %c4_41 = arith.constant 4 : index
    %c0_42 = arith.constant 0 : index
    %53 = vector.load %arg11[%c0_40, %c4_41, %c0_42] : memref<2x8x128xf32, #tpu.memory_space<vmem>>, vector<2x1x128xf32>
    %54 = vector.shape_cast %53 : vector<2x1x128xf32> to vector<2x128xf32>
    %55 = vector.shape_cast %52 : vector<2x128xf32> to vector<2x1x128xf32>
    tpu.vector_store %arg11[%c0_40, %c4_41, %c0_42], %55 {strides = array<i32>} : memref<2x8x128xf32, #tpu.memory_space<vmem>>, vector<2x1x128xf32>,
    %c0_43 = arith.constant 0 : index
    %c5 = arith.constant 5 : index
    %c0_44 = arith.constant 0 : index
    %56 = vector.load %arg11[%c0_43, %c5, %c0_44] : memref<2x8x128xf32, #tpu.memory_space<vmem>>, vector<2x1x128xf32>
    %57 = vector.shape_cast %56 : vector<2x1x128xf32> to vector<2x128xf32>
    %cst_45 = arith.constant dense<0.000000e+00> : vector<2x128xf32>
    %58 = tpu.matmul %52, %14, %cst_45 {dimension_numbers = #tpu.dot_dimension_numbers<[1], [0], [0], [1], [0, 0, 1, 1], [], []>} : vector<2x128xf32>, vector<128x128xf32>, vector<2x128xf32> -> vector<2x128xf32>
    %59 = arith.addf %57, %58 : vector<2x128xf32>
    %60 = math.tanh %59 : vector<2x128xf32>
    %c0_46 = arith.constant 0 : index
    %c5_47 = arith.constant 5 : index
    %c0_48 = arith.constant 0 : index
    %61 = vector.load %arg11[%c0_46, %c5_47, %c0_48] : memref<2x8x128xf32, #tpu.memory_space<vmem>>, vector<2x1x128xf32>
    %62 = vector.shape_cast %61 : vector<2x1x128xf32> to vector<2x128xf32>
    %63 = vector.shape_cast %60 : vector<2x128xf32> to vector<2x1x128xf32>
    tpu.vector_store %arg11[%c0_46, %c5_47, %c0_48], %63 {strides = array<i32>} : memref<2x8x128xf32, #tpu.memory_space<vmem>>, vector<2x1x128xf32>,
    %c0_49 = arith.constant 0 : index
    %c6 = arith.constant 6 : index
    %c0_50 = arith.constant 0 : index
    %64 = vector.load %arg11[%c0_49, %c6, %c0_50] : memref<2x8x128xf32, #tpu.memory_space<vmem>>, vector<2x1x128xf32>
    %65 = vector.shape_cast %64 : vector<2x1x128xf32> to vector<2x128xf32>
    %cst_51 = arith.constant dense<0.000000e+00> : vector<2x128xf32>
    %66 = tpu.matmul %60, %14, %cst_51 {dimension_numbers = #tpu.dot_dimension_numbers<[1], [0], [0], [1], [0, 0, 1, 1], [], []>} : vector<2x128xf32>, vector<128x128xf32>, vector<2x128xf32> -> vector<2x128xf32>
    %67 = arith.addf %65, %66 : vector<2x128xf32>
    %68 = math.tanh %67 : vector<2x128xf32>
    %c0_52 = arith.constant 0 : index
    %c6_53 = arith.constant 6 : index
    %c0_54 = arith.constant 0 : index
    %69 = vector.load %arg11[%c0_52, %c6_53, %c0_54] : memref<2x8x128xf32, #tpu.memory_space<vmem>>, vector<2x1x128xf32>
    %70 = vector.shape_cast %69 : vector<2x1x128xf32> to vector<2x128xf32>
    %71 = vector.shape_cast %68 : vector<2x128xf32> to vector<2x1x128xf32>
    tpu.vector_store %arg11[%c0_52, %c6_53, %c0_54], %71 {strides = array<i32>} : memref<2x8x128xf32, #tpu.memory_space<vmem>>, vector<2x1x128xf32>,
    %c0_55 = arith.constant 0 : index
    %c7 = arith.constant 7 : index
    %c0_56 = arith.constant 0 : index
    %72 = vector.load %arg11[%c0_55, %c7, %c0_56] : memref<2x8x128xf32, #tpu.memory_space<vmem>>, vector<2x1x128xf32>
    %73 = vector.shape_cast %72 : vector<2x1x128xf32> to vector<2x128xf32>
    %cst_57 = arith.constant dense<0.000000e+00> : vector<2x128xf32>
    %74 = tpu.matmul %68, %14, %cst_57 {dimension_numbers = #tpu.dot_dimension_numbers<[1], [0], [0], [1], [0, 0, 1, 1], [], []>} : vector<2x128xf32>, vector<128x128xf32>, vector<2x128xf32> -> vector<2x128xf32>
    %75 = arith.addf %73, %74 : vector<2x128xf32>
    %76 = math.tanh %75 : vector<2x128xf32>
    %c0_58 = arith.constant 0 : index
    %c7_59 = arith.constant 7 : index
    %c0_60 = arith.constant 0 : index
    %77 = vector.load %arg11[%c0_58, %c7_59, %c0_60] : memref<2x8x128xf32, #tpu.memory_space<vmem>>, vector<2x1x128xf32>
    %78 = vector.shape_cast %77 : vector<2x1x128xf32> to vector<2x128xf32>
    %79 = vector.shape_cast %76 : vector<2x128xf32> to vector<2x1x128xf32>
    tpu.vector_store %arg11[%c0_58, %c7_59, %c0_60], %79 {strides = array<i32>} : memref<2x8x128xf32, #tpu.memory_space<vmem>>, vector<2x1x128xf32>,
    %c0_61 = arith.constant 0 : index
    %c0_62 = arith.constant 0 : index
    %80 = vector.load %arg10[%c0_61, %c0_62] : memref<2x128xf32, #tpu.memory_space<vmem>>, vector<2x128xf32>
    tpu.vector_store %arg10[%c0_61, %c0_62], %76 {strides = array<i32>} : memref<2x128xf32, #tpu.memory_space<vmem>>, vector<2x128xf32>,
    %c0_i32_63 = arith.constant 0 : i32
    %81 = arith.cmpi eq, %arg1, %c0_i32_63 : i32
    %82 = arith.extui %81 : i1 to i32
    %c0_i32_64 = arith.constant 0 : i32
    %83 = arith.cmpi ne, %82, %c0_i32_64 : i32
    scf.if %83 {
      %c0_76 = arith.constant 0 : index
      %c0_77 = arith.constant 0 : index
      %93 = vector.load %arg10[%c0_76, %c0_77] : memref<2x128xf32, #tpu.memory_space<vmem>>, vector<2x128xf32>
      %c0_78 = arith.constant 0 : index
      %c0_79 = arith.constant 0 : index
      %94 = vector.load %arg9[%c0_78, %c0_79] : memref<2x128xf32, #tpu.memory_space<vmem>>, vector<2x128xf32>
      tpu.vector_store %arg9[%c0_78, %c0_79], %93 {strides = array<i32>} : memref<2x128xf32, #tpu.memory_space<vmem>>, vector<2x128xf32>,
    } else {
    }
    %c0_65 = arith.constant 0 : index
    %c0_66 = arith.constant 0 : index
    %c0_67 = arith.constant 0 : index
    %84 = vector.load %arg11[%c0_65, %c0_66, %c0_67] : memref<2x8x128xf32, #tpu.memory_space<vmem>>, vector<2x8x128xf32>
    %85 = vector.shape_cast %84 : vector<2x8x128xf32> to vector<16x128xf32>
    %c0_68 = arith.constant 0 : index
    %c0_69 = arith.constant 0 : index
    %86 = vector.load %arg6[%c0_68, %c0_69] : memref<128x16xf32, #tpu.memory_space<vmem>>, vector<128x16xf32>
    %cst_70 = arith.constant dense<0.000000e+00> : vector<16x16xf32>
    %87 = tpu.matmul %85, %86, %cst_70 {dimension_numbers = #tpu.dot_dimension_numbers<[1], [0], [0], [1], [0, 0, 1, 1], [], []>} : vector<16x128xf32>, vector<128x16xf32>, vector<16x16xf32> -> vector<16x16xf32>
    %c0_71 = arith.constant 0 : index
    %c0_72 = arith.constant 0 : index
    %88 = vector.load %arg7[%c0_71, %c0_72] : memref<1x16xf32, #tpu.memory_space<vmem>>, vector<1x16xf32>
    %89 = vector.broadcast %88 : vector<1x16xf32> to vector<16x16xf32>
    %90 = arith.addf %87, %89 : vector<16x16xf32>
    %91 = vector.shape_cast %90 : vector<16x16xf32> to vector<2x8x16xf32>
    %c0_73 = arith.constant 0 : index
    %c0_74 = arith.constant 0 : index
    %c0_75 = arith.constant 0 : index
    %92 = vector.load %arg8[%c0_73, %c0_74, %c0_75] : memref<2x8x16xf32, #tpu.memory_space<vmem>>, vector<2x8x16xf32>
    tpu.vector_store %arg8[%c0_73, %c0_74, %c0_75], %91 {strides = array<i32>} : memref<2x8x16xf32, #tpu.memory_space<vmem>>, vector<2x8x16xf32>,
    return
  }
  func.func @transform_0(%arg0: i32, %arg1: i32) -> (i32, i32, i32) {
    %c0_i32 = arith.constant 0 : i32
    %c0_i32_0 = arith.constant 0 : i32
    return %arg0, %arg1, %c0_i32 : i32, i32, i32
  }
  func.func @transform_1(%arg0: i32, %arg1: i32) -> (i32, i32) {
    %c0_i32 = arith.constant 0 : i32
    %c0_i32_0 = arith.constant 0 : i32
    return %arg0, %c0_i32 : i32, i32
  }
  func.func @transform_2(%arg0: i32, %arg1: i32) -> (i32, i32) {
    %c0_i32 = arith.constant 0 : i32
    %c0_i32_0 = arith.constant 0 : i32
    %c0_i32_1 = arith.constant 0 : i32
    return %c0_i32, %c0_i32_0 : i32, i32
  }
  func.func @transform_3(%arg0: i32, %arg1: i32) -> (i32, i32) {
    %c0_i32 = arith.constant 0 : i32
    %c0_i32_0 = arith.constant 0 : i32
    %c0_i32_1 = arith.constant 0 : i32
    return %c0_i32, %c0_i32_0 : i32, i32
  }
  func.func @transform_4(%arg0: i32, %arg1: i32) -> (i32, i32) {
    %c0_i32 = arith.constant 0 : i32
    %c0_i32_0 = arith.constant 0 : i32
    %c0_i32_1 = arith.constant 0 : i32
    return %c0_i32, %c0_i32_0 : i32, i32
  }
  func.func @transform_5(%arg0: i32, %arg1: i32) -> (i32, i32) {
    %c0_i32 = arith.constant 0 : i32
    %c0_i32_0 = arith.constant 0 : i32
    %c0_i32_1 = arith.constant 0 : i32
    return %c0_i32, %c0_i32_0 : i32, i32
  }
  func.func @transform_6(%arg0: i32, %arg1: i32) -> (i32, i32, i32) {
    %c0_i32 = arith.constant 0 : i32
    %c0_i32_0 = arith.constant 0 : i32
    return %arg0, %arg1, %c0_i32 : i32, i32, i32
  }
  func.func @transform_7(%arg0: i32, %arg1: i32) -> (i32, i32) {
    %c0_i32 = arith.constant 0 : i32
    %c0_i32_0 = arith.constant 0 : i32
    return %arg0, %c0_i32 : i32, i32
  }
}

</mosaic_0001>

<llo_original>
// kernel: tpu_custom_call.1
$region0: #{tpu_custom_call.1}
  #allocation0 [shape = 'u32[]', space=smem, size = 0x4, offset = 0x4, fixed_abs, tag = 'smem constant byte address 0x4 - core index']
  #allocation1 [shape = 'u32[144,128]{1,0:T(1,128)}', space=vmem, size = 0x12000, scoped, tag = 'internal scratch']
  #allocation2 [shape = 'f32[2,128]{1,0:T(2,128)}', space=vmem, size = 0x400, scoped, tag = 'scratch operand']
  #allocation3 [shape = 'f32[2,8,128]{2,1,0:T(8,128)}', space=vmem, size = 0x2000, scoped, tag = 'scratch operand']
  %s0 = inlined_call_operand.vmem [shape: s32[2,8,1], index: 0, kind: input, shape index: {}]
  %s1 = inlined_call_operand.vmem [shape: f32[2,128], index: 1, kind: input, shape index: {}]
  %s2 = inlined_call_operand.vmem [shape: f32[16,128], index: 2, kind: input, shape index: {}]
  %s3 = inlined_call_operand.vmem [shape: f32[128,128], index: 3, kind: input, shape index: {}]
  %s4 = inlined_call_operand.vmem [shape: f32[128,16], index: 4, kind: input, shape index: {}]
  %s5 = inlined_call_operand.vmem [shape: f32[1,16], index: 5, kind: input, shape index: {}]
  %s6 = inlined_call_operand.hbm [shape: f32[2,8,16], index: 6, kind: output, shape index: {0}]
  %s7 = inlined_call_operand.hbm [shape: f32[2,128], index: 7, kind: output, shape index: {1}]
  %8 = xla_tuple %s6, %s7
  %s9 = sld [smem:[#allocation0]]
  $region50: #{tpu_custom_call.1} parent=0
    _
  %s11 = ssub.s32 1, %s9
  %s12 = scalar_select 0, %s11, %s9
  $region1: #{tpu_custom_call.1} parent=0
    #allocation4 [shape = 'u8[8192]{0}', space=vmem, size = 0x2000, scoped, tag = 'output window, operand 0, single buffered']
    #allocation5 [shape = 's32[1]{0}', space=sflag, size = 0x4, scoped, tag = 'scoped memory for tpu_custom_call.1']
    #allocation6 [shape = 'u8[1024]{0}', space=vmem, size = 0x400, scoped, tag = 'output window, operand 1, single buffered']
    #allocation7 [shape = 's32[1]{0}', space=sflag, size = 0x4, scoped, tag = 'scoped memory for tpu_custom_call.1']
    %13 = vsyncpa [#allocation5], 0
    %14 = vsyncpa [#allocation7], 0
    // Predicated region
    $region2: #{tpu_custom_call.1} parent=1 // pred_check
      _
    $region3: #{tpu_custom_call.1} parent=1 // pred_check_branch
      %16 = sbr.rel (0) target = $region5
    $region4: #{tpu_custom_call.1} parent=1 // pred_region
      _
    $region5: #{tpu_custom_call.1} parent=1 // pred_fallthru
      _
    // Predicated region
    $region6: #{tpu_custom_call.1} parent=1 // pred_check
      _
    $region7: #{tpu_custom_call.1} parent=1 // pred_check_branch
      %18 = sbr.rel (0) target = $region9
    $region8: #{tpu_custom_call.1} parent=1 // pred_region
      _
    $region9: #{tpu_custom_call.1} parent=1 // pred_fallthru
      _
    // Predicated region
    $region10: #{tpu_custom_call.1} parent=1 // pred_check
      _
    $region11: #{tpu_custom_call.1} parent=1 // pred_check_branch
      %20 = sbr.rel (0) target = $region13
    $region12: #{tpu_custom_call.1} parent=1 // pred_region
      _
    $region13: #{tpu_custom_call.1} parent=1 // pred_fallthru
      _
    // Predicated region
    $region14: #{tpu_custom_call.1} parent=1 // pred_check
      _
    $region15: #{tpu_custom_call.1} parent=1 // pred_check_branch
      %22 = sbr.rel (0) target = $region17
    $region16: #{tpu_custom_call.1} parent=1 // pred_region
      _
    $region17: #{tpu_custom_call.1} parent=1 // pred_fallthru
      _
    // Predicated region
    $region18: #{tpu_custom_call.1} parent=1 // pred_check
      _
    $region19: #{tpu_custom_call.1} parent=1 // pred_check_branch
      %24 = sbr.rel (0) target = $region21
    $region20: #{tpu_custom_call.1} parent=1 // pred_region
      _
    $region21: #{tpu_custom_call.1} parent=1 // pred_fallthru
      _
    // Predicated region
    $region22: #{tpu_custom_call.1} parent=1 // pred_check
      _
    $region23: #{tpu_custom_call.1} parent=1 // pred_check_branch
      %26 = sbr.rel (0) target = $region25
    $region24: #{tpu_custom_call.1} parent=1 // pred_region
      _
    $region25: #{tpu_custom_call.1} parent=1 // pred_fallthru
      _
    %p27 = scmp.eq.s32.totalorder 0, 0
    // Predicated region
    $region26: #{tpu_custom_call.1} parent=1 // pred_check
      %p28 = pneg %p27
    $region27: #{tpu_custom_call.1} parent=1 // pred_check_branch
      %30 = sbr.rel (%p28) target = $region29
    $region28: #{tpu_custom_call.1} parent=1 // pred_region
      %v31 = vld [vmem:[%s1] sm:$0x3]
      %32 = vst [vmem:[#allocation2] sm:$0x3] %v31
    $region29: #{tpu_custom_call.1} parent=1 // pred_fallthru
      _
    %v33 = vld [vmem:[%s0] sm:$0xff]
    %v34 = vld [vmem:[%s0 + $0x8] sm:$0xff]
    %v35 = vlaneseq
    %v36 = vand.u32 %v35, 127
    %37 = vset.pattern.permute.xlu0 0
    %38 = vperm.xlu0 %37, %v33
    %v39 = vpop.permute.xlu0 %38
    %40 = vset.pattern.permute.xlu0 0
    %41 = vperm.xlu0 %40, %v34
    %v42 = vpop.permute.xlu0 %41
    %vm43 = vcmp.eq.s32.totalorder %v36, %v39
    %vm44 = vcmp.eq.s32.totalorder %v36, %v42
    %v45 = vsel %vm43, 1, 0
    %v46 = vsel %vm44, 1, 0
    %v47 = vcvt.s32.f32 %v45
    %v48 = vcvt.s32.f32 %v46
    %v49 = vld [vmem:[%s2] sm:$0xff]
    %v50 = vld [vmem:[%s2 + $0x8] sm:$0xff]
    %vm51 = vcmask 130048
    %v53 = vsel %vm51, %v47, 0
    %v56 = vsel %vm51, %v48, 0
    %58 = vmatprep.subr.mxu0 0.0
    %59 = vmatpush1.msra.mxu0 %v49
    %60 = vmatprep.subr.mxu0 0.0
    %61 = vmatpush1.msra.mxu0 %v50
    %62 = vmatprep.subr.mxu0 0.0
    %63 = vmatpush1.msra.mxu0 0.0
    %64 = vmatprep.subr.mxu0 0.0
    %65 = vmatpush1.msra.mxu0 0.0
    %66 = vmatprep.subr.mxu0 0.0
    %67 = vmatpush1.msra.mxu0 0.0
    %68 = vmatprep.subr.mxu0 0.0
    %69 = vmatpush1.msra.mxu0 0.0
    %70 = vmatprep.subr.mxu0 0.0
    %71 = vmatpush1.msra.mxu0 0.0
    %72 = vmatprep.subr.mxu0 0.0
    %73 = vmatpush1.msra.mxu0 0.0
    %74 = vmatprep.subr.mxu0 0.0
    %75 = vmatpush1.msra.mxu0 0.0
    %76 = vmatprep.subr.mxu0 0.0
    %77 = vmatpush1.msra.mxu0 0.0
    %78 = vmatprep.subr.mxu0 0.0
    %79 = vmatpush1.msra.mxu0 0.0
    %80 = vmatprep.subr.mxu0 0.0
    %81 = vmatpush1.msra.mxu0 0.0
    %82 = vmatprep.subr.mxu0 0.0
    %83 = vmatpush1.msra.mxu0 0.0
    %84 = vmatprep.subr.mxu0 0.0
    %85 = vmatpush1.msra.mxu0 0.0
    %86 = vmatprep.subr.mxu0 0.0
    %87 = vmatpush1.msra.mxu0 0.0
    %88 = vmatprep.subr.mxu0 0.0
    %89 = vmatpush1.msra.mxu0 0.0
    %90 = vmatprep.subr.mxu0 0.0
    %91 = vmatpush1.msra.mxu0 0.0
    %92 = vmatprep.subr.mxu0 0.0
    %93 = vmatpush1.msra.mxu0 0.0
    %94 = vmatprep.subr.mxu0 0.0
    %95 = vmatpush1.msra.mxu0 0.0
    %96 = vmatprep.subr.mxu0 0.0
    %97 = vmatpush1.msra.mxu0 0.0
    %98 = vmatprep.subr.mxu0 0.0
    %99 = vmatpush1.msra.mxu0 0.0
    %100 = vmatprep.subr.mxu0 0.0
    %101 = vmatpush1.msra.mxu0 0.0
    %102 = vmatprep.subr.mxu0 0.0
    %103 = vmatpush1.msra.mxu0 0.0
    %104 = vmatprep.subr.mxu0 0.0
    %105 = vmatpush1.msra.mxu0 0.0
    %106 = vmatprep.subr.mxu0 0.0
    %107 = vmatpush1.msra.mxu0 0.0
    %108 = vmatprep.subr.mxu0 0.0
    %109 = vmatpush1.msra.mxu0 0.0
    %110 = vmatprep.subr.mxu0 0.0
    %111 = vmatpush1.msra.mxu0 0.0
    %112 = vmatprep.subr.mxu0 0.0
    %113 = vmatpush1.msra.mxu0 0.0
    %114 = vmatprep.subr.mxu0 0.0
    %115 = vmatpush1.msra.mxu0 0.0
    %116 = vmatprep.subr.mxu0 0.0
    %117 = vmatpush1.msra.mxu0 0.0
    %118 = vmatprep.subr.mxu0 0.0
    %119 = vmatpush1.msra.mxu0 0.0
    %120 = vmatprep.subr.mxu0 0.0
    %121 = vmatpush1.msra.mxu0 0.0
    %122 = vmatprep.mubr.f32.mxu0 0.0
    %123 = vmatmul.mubr.f32.gmra.mrb[0].mxu0 %v53
    %v124 = vpop.f32.mrb[0].mxu0
    %v125 = vadd.f32 0.0, %v124
    %v126 = vpop.f32.mrb[0].mxu0
    %127 = vmatprep.mubr.f32.mxu0 0.0
    %128 = vmatmul.mubr.f32.gmra.mrb[0].mxu0 %v56
    %v129 = vpop.f32.mrb[0].mxu0
    %v130 = vadd.f32 0.0, %v129
    %v131 = vpop.f32.mrb[0].mxu0
    %132 = vdwg.mxu0
    %133 = vst [vmem:[#allocation3] sm:$0xff] %v125
    %134 = vst [vmem:[#allocation3 + $0x8] sm:$0xff] %v130
    %v135 = vld [vmem:[%s3] sm:$0xff]
    %v136 = vld [vmem:[%s3 + $0x8] sm:$0xff]
    %v137 = vld [vmem:[%s3 + $0x10] sm:$0xff]
    %v138 = vld [vmem:[%s3 + $0x18] sm:$0xff]
    %v139 = vld [vmem:[%s3 + $0x20] sm:$0xff]
    %v140 = vld [vmem:[%s3 + $0x28] sm:$0xff]
    %v141 = vld [vmem:[%s3 + $0x30] sm:$0xff]
    %v142 = vld [vmem:[%s3 + $0x38] sm:$0xff]
    %v143 = vld [vmem:[%s3 + $0x40] sm:$0xff]
    %v144 = vld [vmem:[%s3 + $0x48] sm:$0xff]
    %v145 = vld [vmem:[%s3 + $0x50] sm:$0xff]
    %v146 = vld [vmem:[%s3 + $0x58] sm:$0xff]
    %v147 = vld [vmem:[%s3 + $0x60] sm:$0xff]
    %v148 = vld [vmem:[%s3 + $0x68] sm:$0xff]
    %v149 = vld [vmem:[%s3 + $0x70] sm:$0xff]
    %v150 = vld [vmem:[%s3 + $0x78] sm:$0xff]
    %v151 = vld [vmem:[#allocation2] sm:$0x3]
    %v152 = vld [vmem:[#allocation3] sm:$0x1]
    %v153 = vld [vmem:[#allocation3 + $0x8] sm:$0x1]
    %154 = vmatprep.subr.mxu0 0.0
    %155 = vmatpush1.msra.mxu0 %v135
    %156 = vmatprep.subr.mxu0 0.0
    %157 = vmatpush1.msra.mxu0 %v136
    %158 = vmatprep.subr.mxu0 0.0
    %159 = vmatpush1.msra.mxu0 %v137
    %160 = vmatprep.subr.mxu0 0.0
    %161 = vmatpush1.msra.mxu0 %v138
    %162 = vmatprep.subr.mxu0 0.0
    %163 = vmatpush1.msra.mxu0 %v139
    %164 = vmatprep.subr.mxu0 0.0
    %165 = vmatpush1.msra.mxu0 %v140
    %166 = vmatprep.subr.mxu0 0.0
    %167 = vmatpush1.msra.mxu0 %v141
    %168 = vmatprep.subr.mxu0 0.0
    %169 = vmatpush1.msra.mxu0 %v142
    %170 = vmatprep.subr.mxu0 0.0
    %171 = vmatpush1.msra.mxu0 %v143
    %172 = vmatprep.subr.mxu0 0.0
    %173 = vmatpush1.msra.mxu0 %v144
    %174 = vmatprep.subr.mxu0 0.0
    %175 = vmatpush1.msra.mxu0 %v145
    %176 = vmatprep.subr.mxu0 0.0
    %177 = vmatpush1.msra.mxu0 %v146
    %178 = vmatprep.subr.mxu0 0.0
    %179 = vmatpush1.msra.mxu0 %v147
    %180 = vmatprep.subr.mxu0 0.0
    %181 = vmatpush1.msra.mxu0 %v148
    %182 = vmatprep.subr.mxu0 0.0
    %183 = vmatpush1.msra.mxu0 %v149
    %184 = vmatprep.subr.mxu0 0.0
    %185 = vmatpush1.msra.mxu0 %v150
    %186 = vmatprep.subr.mxu0 0.0
    %187 = vmatpush1.msra.mxu0 0.0
    %188 = vmatprep.subr.mxu0 0.0
    %189 = vmatpush1.msra.mxu0 0.0
    %190 = vmatprep.subr.mxu0 0.0
    %191 = vmatpush1.msra.mxu0 0.0
    %192 = vmatprep.subr.mxu0 0.0
    %193 = vmatpush1.msra.mxu0 0.0
    %194 = vmatprep.subr.mxu0 0.0
    %195 = vmatpush1.msra.mxu0 0.0
    %196 = vmatprep.subr.mxu0 0.0
    %197 = vmatpush1.msra.mxu0 0.0
    %198 = vmatprep.subr.mxu0 0.0
    %199 = vmatpush1.msra.mxu0 0.0
    %200 = vmatprep.subr.mxu0 0.0
    %201 = vmatpush1.msra.mxu0 0.0
    %202 = vmatprep.subr.mxu0 0.0
    %203 = vmatpush1.msra.mxu0 0.0
    %204 = vmatprep.subr.mxu0 0.0
    %205 = vmatpush1.msra.mxu0 0.0
    %206 = vmatprep.subr.mxu0 0.0
    %207 = vmatpush1.msra.mxu0 0.0
    %208 = vmatprep.subr.mxu0 0.0
    %209 = vmatpush1.msra.mxu0 0.0
    %210 = vmatprep.subr.mxu0 0.0
    %211 = vmatpush1.msra.mxu0 0.0
    %212 = vmatprep.subr.mxu0 0.0
    %213 = vmatpush1.msra.mxu0 0.0
    %214 = vmatprep.subr.mxu0 0.0
    %215 = vmatpush1.msra.mxu0 0.0
    %216 = vmatprep.subr.mxu0 0.0
    %217 = vmatpush1.msra.mxu0 0.0
    %218 = vmatprep.mubr.f32.mxu0 0.0
    %219 = vmatmul.mubr.f32.gmra.mrb[0].mxu0 %v151
    %v220 = vpop.f32.mrb[0].mxu0
    %v221 = vadd.f32 0.0, %v220
    %v222 = vpop.f32.mrb[0].mxu0
    %223 = vdwg.mxu0
    %v225 = vrot.slane %v221, 1
    %v228 = vadd.f32 %v152, %v221
    %v229 = vadd.f32 %v153, %v225
    %v230 = vtanh.pop %v228
    %v231 = vtanh.pop %v229
    %232 = vst [vmem:[#allocation3] sm:$0x1] %v230
    %233 = vst [vmem:[#allocation3 + $0x8] sm:$0x1] %v231
    %v234 = vld [vmem:[#allocation3 + $0x1] sm:$0x1]
    %v235 = vld [vmem:[#allocation3 + $0x9] sm:$0x1]
    %v238 = vrot.slane %v231, 7
    %vm239 = vcmask 1041409
    %v240 = vsel %vm239, %v238, %v230
    %242 = vmatprep.subr.mxu0 0.0
    %243 = vmatpush1.msra.mxu0 %v135
    %244 = vmatprep.subr.mxu0 0.0
    %245 = vmatpush1.msra.mxu0 %v136
    %246 = vmatprep.subr.mxu0 0.0
    %247 = vmatpush1.msra.mxu0 %v137
    %248 = vmatprep.subr.mxu0 0.0
    %249 = vmatpush1.msra.mxu0 %v138
    %250 = vmatprep.subr.mxu0 0.0
    %251 = vmatpush1.msra.mxu0 %v139
    %252 = vmatprep.subr.mxu0 0.0
    %253 = vmatpush1.msra.mxu0 %v140
    %254 = vmatprep.subr.mxu0 0.0
    %255 = vmatpush1.msra.mxu0 %v141
    %256 = vmatprep.subr.mxu0 0.0
    %257 = vmatpush1.msra.mxu0 %v142
    %258 = vmatprep.subr.mxu0 0.0
    %259 = vmatpush1.msra.mxu0 %v143
    %260 = vmatprep.subr.mxu0 0.0
    %261 = vmatpush1.msra.mxu0 %v144
    %262 = vmatprep.subr.mxu0 0.0
    %263 = vmatpush1.msra.mxu0 %v145
    %264 = vmatprep.subr.mxu0 0.0
    %265 = vmatpush1.msra.mxu0 %v146
    %266 = vmatprep.subr.mxu0 0.0
    %267 = vmatpush1.msra.mxu0 %v147
    %268 = vmatprep.subr.mxu0 0.0
    %269 = vmatpush1.msra.mxu0 %v148
    %270 = vmatprep.subr.mxu0 0.0
    %271 = vmatpush1.msra.mxu0 %v149
    %272 = vmatprep.subr.mxu0 0.0
    %273 = vmatpush1.msra.mxu0 %v150
    %274 = vmatprep.subr.mxu0 0.0
    %275 = vmatpush1.msra.mxu0 0.0
    %276 = vmatprep.subr.mxu0 0.0
    %277 = vmatpush1.msra.mxu0 0.0
    %278 = vmatprep.subr.mxu0 0.0
    %279 = vmatpush1.msra.mxu0 0.0
    %280 = vmatprep.subr.mxu0 0.0
    %281 = vmatpush1.msra.mxu0 0.0
    %282 = vmatprep.subr.mxu0 0.0
    %283 = vmatpush1.msra.mxu0 0.0
    %284 = vmatprep.subr.mxu0 0.0
    %285 = vmatpush1.msra.mxu0 0.0
    %286 = vmatprep.subr.mxu0 0.0
    %287 = vmatpush1.msra.mxu0 0.0
    %288 = vmatprep.subr.mxu0 0.0
    %289 = vmatpush1.msra.mxu0 0.0
    %290 = vmatprep.subr.mxu0 0.0
    %291 = vmatpush1.msra.mxu0 0.0
    %292 = vmatprep.subr.mxu0 0.0
    %293 = vmatpush1.msra.mxu0 0.0
    %294 = vmatprep.subr.mxu0 0.0
    %295 = vmatpush1.msra.mxu0 0.0
    %296 = vmatprep.subr.mxu0 0.0
    %297 = vmatpush1.msra.mxu0 0.0
    %298 = vmatprep.subr.mxu0 0.0
    %299 = vmatpush1.msra.mxu0 0.0
    %300 = vmatprep.subr.mxu0 0.0
    %301 = vmatpush1.msra.mxu0 0.0
    %302 = vmatprep.subr.mxu0 0.0
    %303 = vmatpush1.msra.mxu0 0.0
    %304 = vmatprep.subr.mxu0 0.0
    %305 = vmatpush1.msra.mxu0 0.0
    %306 = vmatprep.mubr.f32.mxu0 0.0
    %307 = vmatmul.mubr.f32.gmra.mrb[0].mxu0 %v240
    %v308 = vpop.f32.mrb[0].mxu0
    %v309 = vadd.f32 0.0, %v308
    %v310 = vpop.f32.mrb[0].mxu0
    %311 = vdwg.mxu0
    %v313 = vrot.slane %v309, 1
    %v316 = vadd.f32 %v234, %v309
    %v317 = vadd.f32 %v235, %v313
    %v318 = vtanh.pop %v316
    %v319 = vtanh.pop %v317
    %320 = vst [vmem:[#allocation3 + $0x1] sm:$0x1] %v318
    %321 = vst [vmem:[#allocation3 + $0x9] sm:$0x1] %v319
    %v322 = vld [vmem:[#allocation3 + $0x2] sm:$0x1]
    %v323 = vld [vmem:[#allocation3 + $0xa] sm:$0x1]
    %v326 = vrot.slane %v319, 7
    %v327 = vsel %vm239, %v326, %v318
    %329 = vmatprep.subr.mxu0 0.0
    %330 = vmatpush1.msra.mxu0 %v135
    %331 = vmatprep.subr.mxu0 0.0
    %332 = vmatpush1.msra.mxu0 %v136
    %333 = vmatprep.subr.mxu0 0.0
    %334 = vmatpush1.msra.mxu0 %v137
    %335 = vmatprep.subr.mxu0 0.0
    %336 = vmatpush1.msra.mxu0 %v138
    %337 = vmatprep.subr.mxu0 0.0
    %338 = vmatpush1.msra.mxu0 %v139
    %339 = vmatprep.subr.mxu0 0.0
    %340 = vmatpush1.msra.mxu0 %v140
    %341 = vmatprep.subr.mxu0 0.0
    %342 = vmatpush1.msra.mxu0 %v141
    %343 = vmatprep.subr.mxu0 0.0
    %344 = vmatpush1.msra.mxu0 %v142
    %345 = vmatprep.subr.mxu0 0.0
    %346 = vmatpush1.msra.mxu0 %v143
    %347 = vmatprep.subr.mxu0 0.0
    %348 = vmatpush1.msra.mxu0 %v144
    %349 = vmatprep.subr.mxu0 0.0
    %350 = vmatpush1.msra.mxu0 %v145
    %351 = vmatprep.subr.mxu0 0.0
    %352 = vmatpush1.msra.mxu0 %v146
    %353 = vmatprep.subr.mxu0 0.0
    %354 = vmatpush1.msra.mxu0 %v147
    %355 = vmatprep.subr.mxu0 0.0
    %356 = vmatpush1.msra.mxu0 %v148
    %357 = vmatprep.subr.mxu0 0.0
    %358 = vmatpush1.msra.mxu0 %v149
    %359 = vmatprep.subr.mxu0 0.0
    %360 = vmatpush1.msra.mxu0 %v150
    %361 = vmatprep.subr.mxu0 0.0
    %362 = vmatpush1.msra.mxu0 0.0
    %363 = vmatprep.subr.mxu0 0.0
    %364 = vmatpush1.msra.mxu0 0.0
    %365 = vmatprep.subr.mxu0 0.0
    %366 = vmatpush1.msra.mxu0 0.0
    %367 = vmatprep.subr.mxu0 0.0
    %368 = vmatpush1.msra.mxu0 0.0
    %369 = vmatprep.subr.mxu0 0.0
    %370 = vmatpush1.msra.mxu0 0.0
    %371 = vmatprep.subr.mxu0 0.0
    %372 = vmatpush1.msra.mxu0 0.0
    %373 = vmatprep.subr.mxu0 0.0
    %374 = vmatpush1.msra.mxu0 0.0
    %375 = vmatprep.subr.mxu0 0.0
    %376 = vmatpush1.msra.mxu0 0.0
    %377 = vmatprep.subr.mxu0 0.0
    %378 = vmatpush1.msra.mxu0 0.0
    %379 = vmatprep.subr.mxu0 0.0
    %380 = vmatpush1.msra.mxu0 0.0
    %381 = vmatprep.subr.mxu0 0.0
    %382 = vmatpush1.msra.mxu0 0.0
    %383 = vmatprep.subr.mxu0 0.0
    %384 = vmatpush1.msra.mxu0 0.0
    %385 = vmatprep.subr.mxu0 0.0
    %386 = vmatpush1.msra.mxu0 0.0
    %387 = vmatprep.subr.mxu0 0.0
    %388 = vmatpush1.msra.mxu0 0.0
    %389 = vmatprep.subr.mxu0 0.0
    %390 = vmatpush1.msra.mxu0 0.0
    %391 = vmatprep.subr.mxu0 0.0
    %392 = vmatpush1.msra.mxu0 0.0
    %393 = vmatprep.mubr.f32.mxu0 0.0
    %394 = vmatmul.mubr.f32.gmra.mrb[0].mxu0 %v327
    %v395 = vpop.f32.mrb[0].mxu0
    %v396 = vadd.f32 0.0, %v395
    %v397 = vpop.f32.mrb[0].mxu0
    %398 = vdwg.mxu0
    %v400 = vrot.slane %v396, 1
    %v403 = vadd.f32 %v322, %v396
    %v404 = vadd.f32 %v323, %v400
    %v405 = vtanh.pop %v403
    %v406 = vtanh.pop %v404
    %407 = vst [vmem:[#allocation3 + $0x2] sm:$0x1] %v405
    %408 = vst [vmem:[#allocation3 + $0xa] sm:$0x1] %v406
    %v409 = vld [vmem:[#allocation3 + $0x3] sm:$0x1]
    %v410 = vld [vmem:[#allocation3 + $0xb] sm:$0x1]
    %v413 = vrot.slane %v406, 7
    %v414 = vsel %vm239, %v413, %v405
    %416 = vmatprep.subr.mxu0 0.0
    %417 = vmatpush1.msra.mxu0 %v135
    %418 = vmatprep.subr.mxu0 0.0
    %419 = vmatpush1.msra.mxu0 %v136
    %420 = vmatprep.subr.mxu0 0.0
    %421 = vmatpush1.msra.mxu0 %v137
    %422 = vmatprep.subr.mxu0 0.0
    %423 = vmatpush1.msra.mxu0 %v138
    %424 = vmatprep.subr.mxu0 0.0
    %425 = vmatpush1.msra.mxu0 %v139
    %426 = vmatprep.subr.mxu0 0.0
    %427 = vmatpush1.msra.mxu0 %v140
    %428 = vmatprep.subr.mxu0 0.0
    %429 = vmatpush1.msra.mxu0 %v141
    %430 = vmatprep.subr.mxu0 0.0
    %431 = vmatpush1.msra.mxu0 %v142
    %432 = vmatprep.subr.mxu0 0.0
    %433 = vmatpush1.msra.mxu0 %v143
    %434 = vmatprep.subr.mxu0 0.0
    %435 = vmatpush1.msra.mxu0 %v144
    %436 = vmatprep.subr.mxu0 0.0
    %437 = vmatpush1.msra.mxu0 %v145
    %438 = vmatprep.subr.mxu0 0.0
    %439 = vmatpush1.msra.mxu0 %v146
    %440 = vmatprep.subr.mxu0 0.0
    %441 = vmatpush1.msra.mxu0 %v147
    %442 = vmatprep.subr.mxu0 0.0
    %443 = vmatpush1.msra.mxu0 %v148
    %444 = vmatprep.subr.mxu0 0.0
    %445 = vmatpush1.msra.mxu0 %v149
    %446 = vmatprep.subr.mxu0 0.0
    %447 = vmatpush1.msra.mxu0 %v150
    %448 = vmatprep.subr.mxu0 0.0
    %449 = vmatpush1.msra.mxu0 0.0
    %450 = vmatprep.subr.mxu0 0.0
    %451 = vmatpush1.msra.mxu0 0.0
    %452 = vmatprep.subr.mxu0 0.0
    %453 = vmatpush1.msra.mxu0 0.0
    %454 = vmatprep.subr.mxu0 0.0
    %455 = vmatpush1.msra.mxu0 0.0
    %456 = vmatprep.subr.mxu0 0.0
    %457 = vmatpush1.msra.mxu0 0.0
    %458 = vmatprep.subr.mxu0 0.0
    %459 = vmatpush1.msra.mxu0 0.0
    %460 = vmatprep.subr.mxu0 0.0
    %461 = vmatpush1.msra.mxu0 0.0
    %462 = vmatprep.subr.mxu0 0.0
    %463 = vmatpush1.msra.mxu0 0.0
    %464 = vmatprep.subr.mxu0 0.0
    %465 = vmatpush1.msra.mxu0 0.0
    %466 = vmatprep.subr.mxu0 0.0
    %467 = vmatpush1.msra.mxu0 0.0
    %468 = vmatprep.subr.mxu0 0.0
    %469 = vmatpush1.msra.mxu0 0.0
    %470 = vmatprep.subr.mxu0 0.0
    %471 = vmatpush1.msra.mxu0 0.0
    %472 = vmatprep.subr.mxu0 0.0
    %473 = vmatpush1.msra.mxu0 0.0
    %474 = vmatprep.subr.mxu0 0.0
    %475 = vmatpush1.msra.mxu0 0.0
    %476 = vmatprep.subr.mxu0 0.0
    %477 = vmatpush1.msra.mxu0 0.0
    %478 = vmatprep.subr.mxu0 0.0
    %479 = vmatpush1.msra.mxu0 0.0
    %480 = vmatprep.mubr.f32.mxu0 0.0
    %481 = vmatmul.mubr.f32.gmra.mrb[0].mxu0 %v414
    %v482 = vpop.f32.mrb[0].mxu0
    %v483 = vadd.f32 0.0, %v482
    %v484 = vpop.f32.mrb[0].mxu0
    %485 = vdwg.mxu0
    %v487 = vrot.slane %v483, 1
    %v490 = vadd.f32 %v409, %v483
    %v491 = vadd.f32 %v410, %v487
    %v492 = vtanh.pop %v490
    %v493 = vtanh.pop %v491
    %494 = vst [vmem:[#allocation3 + $0x3] sm:$0x1] %v492
    %495 = vst [vmem:[#allocation3 + $0xb] sm:$0x1] %v493
    %v496 = vld [vmem:[#allocation3 + $0x4] sm:$0x1]
    %v497 = vld [vmem:[#allocation3 + $0xc] sm:$0x1]
    %v500 = vrot.slane %v493, 7
    %v501 = vsel %vm239, %v500, %v492
    %503 = vmatprep.subr.mxu0 0.0
    %504 = vmatpush1.msra.mxu0 %v135
    %505 = vmatprep.subr.mxu0 0.0
    %506 = vmatpush1.msra.mxu0 %v136
    %507 = vmatprep.subr.mxu0 0.0
    %508 = vmatpush1.msra.mxu0 %v137
    %509 = vmatprep.subr.mxu0 0.0
    %510 = vmatpush1.msra.mxu0 %v138
    %511 = vmatprep.subr.mxu0 0.0
    %512 = vmatpush1.msra.mxu0 %v139
    %513 = vmatprep.subr.mxu0 0.0
    %514 = vmatpush1.msra.mxu0 %v140
    %515 = vmatprep.subr.mxu0 0.0
    %516 = vmatpush1.msra.mxu0 %v141
    %517 = vmatprep.subr.mxu0 0.0
    %518 = vmatpush1.msra.mxu0 %v142
    %519 = vmatprep.subr.mxu0 0.0
    %520 = vmatpush1.msra.mxu0 %v143
    %521 = vmatprep.subr.mxu0 0.0
    %522 = vmatpush1.msra.mxu0 %v144
    %523 = vmatprep.subr.mxu0 0.0
    %524 = vmatpush1.msra.mxu0 %v145
    %525 = vmatprep.subr.mxu0 0.0
    %526 = vmatpush1.msra.mxu0 %v146
    %527 = vmatprep.subr.mxu0 0.0
    %528 = vmatpush1.msra.mxu0 %v147
    %529 = vmatprep.subr.mxu0 0.0
    %530 = vmatpush1.msra.mxu0 %v148
    %531 = vmatprep.subr.mxu0 0.0
    %532 = vmatpush1.msra.mxu0 %v149
    %533 = vmatprep.subr.mxu0 0.0
    %534 = vmatpush1.msra.mxu0 %v150
    %535 = vmatprep.subr.mxu0 0.0
    %536 = vmatpush1.msra.mxu0 0.0
    %537 = vmatprep.subr.mxu0 0.0
    %538 = vmatpush1.msra.mxu0 0.0
    %539 = vmatprep.subr.mxu0 0.0
    %540 = vmatpush1.msra.mxu0 0.0
    %541 = vmatprep.subr.mxu0 0.0
    %542 = vmatpush1.msra.mxu0 0.0
    %543 = vmatprep.subr.mxu0 0.0
    %544 = vmatpush1.msra.mxu0 0.0
    %545 = vmatprep.subr.mxu0 0.0
    %546 = vmatpush1.msra.mxu0 0.0
    %547 = vmatprep.subr.mxu0 0.0
    %548 = vmatpush1.msra.mxu0 0.0
    %549 = vmatprep.subr.mxu0 0.0
    %550 = vmatpush1.msra.mxu0 0.0
    %551 = vmatprep.subr.mxu0 0.0
    %552 = vmatpush1.msra.mxu0 0.0
    %553 = vmatprep.subr.mxu0 0.0
    %554 = vmatpush1.msra.mxu0 0.0
    %555 = vmatprep.subr.mxu0 0.0
    %556 = vmatpush1.msra.mxu0 0.0
    %557 = vmatprep.subr.mxu0 0.0
    %558 = vmatpush1.msra.mxu0 0.0
    %559 = vmatprep.subr.mxu0 0.0
    %560 = vmatpush1.msra.mxu0 0.0
    %561 = vmatprep.subr.mxu0 0.0
    %562 = vmatpush1.msra.mxu0 0.0
    %563 = vmatprep.subr.mxu0 0.0
    %564 = vmatpush1.msra.mxu0 0.0
    %565 = vmatprep.subr.mxu0 0.0
    %566 = vmatpush1.msra.mxu0 0.0
    %567 = vmatprep.mubr.f32.mxu0 0.0
    %568 = vmatmul.mubr.f32.gmra.mrb[0].mxu0 %v501
    %v569 = vpop.f32.mrb[0].mxu0
    %v570 = vadd.f32 0.0, %v569
    %v571 = vpop.f32.mrb[0].mxu0
    %572 = vdwg.mxu0
    %v574 = vrot.slane %v570, 1
    %v577 = vadd.f32 %v496, %v570
    %v578 = vadd.f32 %v497, %v574
    %v579 = vtanh.pop %v577
    %v580 = vtanh.pop %v578
    %581 = vst [vmem:[#allocation3 + $0x4] sm:$0x1] %v579
    %582 = vst [vmem:[#allocation3 + $0xc] sm:$0x1] %v580
    %v583 = vld [vmem:[#allocation3 + $0x5] sm:$0x1]
    %v584 = vld [vmem:[#allocation3 + $0xd] sm:$0x1]
    %v587 = vrot.slane %v580, 7
    %v588 = vsel %vm239, %v587, %v579
    %590 = vmatprep.subr.mxu0 0.0
    %591 = vmatpush1.msra.mxu0 %v135
    %592 = vmatprep.subr.mxu0 0.0
    %593 = vmatpush1.msra.mxu0 %v136
    %594 = vmatprep.subr.mxu0 0.0
    %595 = vmatpush1.msra.mxu0 %v137
    %596 = vmatprep.subr.mxu0 0.0
    %597 = vmatpush1.msra.mxu0 %v138
    %598 = vmatprep.subr.mxu0 0.0
    %599 = vmatpush1.msra.mxu0 %v139
    %600 = vmatprep.subr.mxu0 0.0
    %601 = vmatpush1.msra.mxu0 %v140
    %602 = vmatprep.subr.mxu0 0.0
    %603 = vmatpush1.msra.mxu0 %v141
    %604 = vmatprep.subr.mxu0 0.0
    %605 = vmatpush1.msra.mxu0 %v142
    %606 = vmatprep.subr.mxu0 0.0
    %607 = vmatpush1.msra.mxu0 %v143
    %608 = vmatprep.subr.mxu0 0.0
    %609 = vmatpush1.msra.mxu0 %v144
    %610 = vmatprep.subr.mxu0 0.0
    %611 = vmatpush1.msra.mxu0 %v145
    %612 = vmatprep.subr.mxu0 0.0
    %613 = vmatpush1.msra.mxu0 %v146
    %614 = vmatprep.subr.mxu0 0.0
    %615 = vmatpush1.msra.mxu0 %v147
    %616 = vmatprep.subr.mxu0 0.0
    %617 = vmatpush1.msra.mxu0 %v148
    %618 = vmatprep.subr.mxu0 0.0
    %619 = vmatpush1.msra.mxu0 %v149
    %620 = vmatprep.subr.mxu0 0.0
    %621 = vmatpush1.msra.mxu0 %v150
    %622 = vmatprep.subr.mxu0 0.0
    %623 = vmatpush1.msra.mxu0 0.0
    %624 = vmatprep.subr.mxu0 0.0
    %625 = vmatpush1.msra.mxu0 0.0
    %626 = vmatprep.subr.mxu0 0.0
    %627 = vmatpush1.msra.mxu0 0.0
    %628 = vmatprep.subr.mxu0 0.0
    %629 = vmatpush1.msra.mxu0 0.0
    %630 = vmatprep.subr.mxu0 0.0
    %631 = vmatpush1.msra.mxu0 0.0
    %632 = vmatprep.subr.mxu0 0.0
    %633 = vmatpush1.msra.mxu0 0.0
    %634 = vmatprep.subr.mxu0 0.0
    %635 = vmatpush1.msra.mxu0 0.0
    %636 = vmatprep.subr.mxu0 0.0
    %637 = vmatpush1.msra.mxu0 0.0
    %638 = vmatprep.subr.mxu0 0.0
    %639 = vmatpush1.msra.mxu0 0.0
    %640 = vmatprep.subr.mxu0 0.0
    %641 = vmatpush1.msra.mxu0 0.0
    %642 = vmatprep.subr.mxu0 0.0
    %643 = vmatpush1.msra.mxu0 0.0
    %644 = vmatprep.subr.mxu0 0.0
    %645 = vmatpush1.msra.mxu0 0.0
    %646 = vmatprep.subr.mxu0 0.0
    %647 = vmatpush1.msra.mxu0 0.0
    %648 = vmatprep.subr.mxu0 0.0
    %649 = vmatpush1.msra.mxu0 0.0
    %650 = vmatprep.subr.mxu0 0.0
    %651 = vmatpush1.msra.mxu0 0.0
    %652 = vmatprep.subr.mxu0 0.0
    %653 = vmatpush1.msra.mxu0 0.0
    %654 = vmatprep.mubr.f32.mxu0 0.0
    %655 = vmatmul.mubr.f32.gmra.mrb[0].mxu0 %v588
    %v656 = vpop.f32.mrb[0].mxu0
    %v657 = vadd.f32 0.0, %v656
    %v658 = vpop.f32.mrb[0].mxu0
    %659 = vdwg.mxu0
    %v661 = vrot.slane %v657, 1
    %v664 = vadd.f32 %v583, %v657
    %v665 = vadd.f32 %v584, %v661
    %v666 = vtanh.pop %v664
    %v667 = vtanh.pop %v665
    %668 = vst [vmem:[#allocation3 + $0x5] sm:$0x1] %v666
    %669 = vst [vmem:[#allocation3 + $0xd] sm:$0x1] %v667
    %v670 = vld [vmem:[#allocation3 + $0x6] sm:$0x1]
    %v671 = vld [vmem:[#allocation3 + $0xe] sm:$0x1]
    %v674 = vrot.slane %v667, 7
    %v675 = vsel %vm239, %v674, %v666
    %677 = vmatprep.subr.mxu0 0.0
    %678 = vmatpush1.msra.mxu0 %v135
    %679 = vmatprep.subr.mxu0 0.0
    %680 = vmatpush1.msra.mxu0 %v136
    %681 = vmatprep.subr.mxu0 0.0
    %682 = vmatpush1.msra.mxu0 %v137
    %683 = vmatprep.subr.mxu0 0.0
    %684 = vmatpush1.msra.mxu0 %v138
    %685 = vmatprep.subr.mxu0 0.0
    %686 = vmatpush1.msra.mxu0 %v139
    %687 = vmatprep.subr.mxu0 0.0
    %688 = vmatpush1.msra.mxu0 %v140
    %689 = vmatprep.subr.mxu0 0.0
    %690 = vmatpush1.msra.mxu0 %v141
    %691 = vmatprep.subr.mxu0 0.0
    %692 = vmatpush1.msra.mxu0 %v142
    %693 = vmatprep.subr.mxu0 0.0
    %694 = vmatpush1.msra.mxu0 %v143
    %695 = vmatprep.subr.mxu0 0.0
    %696 = vmatpush1.msra.mxu0 %v144
    %697 = vmatprep.subr.mxu0 0.0
    %698 = vmatpush1.msra.mxu0 %v145
    %699 = vmatprep.subr.mxu0 0.0
    %700 = vmatpush1.msra.mxu0 %v146
    %701 = vmatprep.subr.mxu0 0.0
    %702 = vmatpush1.msra.mxu0 %v147
    %703 = vmatprep.subr.mxu0 0.0
    %704 = vmatpush1.msra.mxu0 %v148
    %705 = vmatprep.subr.mxu0 0.0
    %706 = vmatpush1.msra.mxu0 %v149
    %707 = vmatprep.subr.mxu0 0.0
    %708 = vmatpush1.msra.mxu0 %v150
    %709 = vmatprep.subr.mxu0 0.0
    %710 = vmatpush1.msra.mxu0 0.0
    %711 = vmatprep.subr.mxu0 0.0
    %712 = vmatpush1.msra.mxu0 0.0
    %713 = vmatprep.subr.mxu0 0.0
    %714 = vmatpush1.msra.mxu0 0.0
    %715 = vmatprep.subr.mxu0 0.0
    %716 = vmatpush1.msra.mxu0 0.0
    %717 = vmatprep.subr.mxu0 0.0
    %718 = vmatpush1.msra.mxu0 0.0
    %719 = vmatprep.subr.mxu0 0.0
    %720 = vmatpush1.msra.mxu0 0.0
    %721 = vmatprep.subr.mxu0 0.0
    %722 = vmatpush1.msra.mxu0 0.0
    %723 = vmatprep.subr.mxu0 0.0
    %724 = vmatpush1.msra.mxu0 0.0
    %725 = vmatprep.subr.mxu0 0.0
    %726 = vmatpush1.msra.mxu0 0.0
    %727 = vmatprep.subr.mxu0 0.0
    %728 = vmatpush1.msra.mxu0 0.0
    %729 = vmatprep.subr.mxu0 0.0
    %730 = vmatpush1.msra.mxu0 0.0
    %731 = vmatprep.subr.mxu0 0.0
    %732 = vmatpush1.msra.mxu0 0.0
    %733 = vmatprep.subr.mxu0 0.0
    %734 = vmatpush1.msra.mxu0 0.0
    %735 = vmatprep.subr.mxu0 0.0
    %736 = vmatpush1.msra.mxu0 0.0
    %737 = vmatprep.subr.mxu0 0.0
    %738 = vmatpush1.msra.mxu0 0.0
    %739 = vmatprep.subr.mxu0 0.0
    %740 = vmatpush1.msra.mxu0 0.0
    %741 = vmatprep.mubr.f32.mxu0 0.0
    %742 = vmatmul.mubr.f32.gmra.mrb[0].mxu0 %v675
    %v743 = vpop.f32.mrb[0].mxu0
    %v744 = vadd.f32 0.0, %v743
    %v745 = vpop.f32.mrb[0].mxu0
    %746 = vdwg.mxu0
    %v748 = vrot.slane %v744, 1
    %v751 = vadd.f32 %v670, %v744
    %v752 = vadd.f32 %v671, %v748
    %v753 = vtanh.pop %v751
    %v754 = vtanh.pop %v752
    %755 = vst [vmem:[#allocation3 + $0x6] sm:$0x1] %v753
    %756 = vst [vmem:[#allocation3 + $0xe] sm:$0x1] %v754
    %v757 = vld [vmem:[#allocation3 + $0x7] sm:$0x1]
    %v758 = vld [vmem:[#allocation3 + $0xf] sm:$0x1]
    %v761 = vrot.slane %v754, 7
    %v762 = vsel %vm239, %v761, %v753
    %764 = vmatprep.subr.mxu0 0.0
    %765 = vmatpush1.msra.mxu0 %v135
    %766 = vmatprep.subr.mxu0 0.0
    %767 = vmatpush1.msra.mxu0 %v136
    %768 = vmatprep.subr.mxu0 0.0
    %769 = vmatpush1.msra.mxu0 %v137
    %770 = vmatprep.subr.mxu0 0.0
    %771 = vmatpush1.msra.mxu0 %v138
    %772 = vmatprep.subr.mxu0 0.0
    %773 = vmatpush1.msra.mxu0 %v139
    %774 = vmatprep.subr.mxu0 0.0
    %775 = vmatpush1.msra.mxu0 %v140
    %776 = vmatprep.subr.mxu0 0.0
    %777 = vmatpush1.msra.mxu0 %v141
    %778 = vmatprep.subr.mxu0 0.0
    %779 = vmatpush1.msra.mxu0 %v142
    %780 = vmatprep.subr.mxu0 0.0
    %781 = vmatpush1.msra.mxu0 %v143
    %782 = vmatprep.subr.mxu0 0.0
    %783 = vmatpush1.msra.mxu0 %v144
    %784 = vmatprep.subr.mxu0 0.0
    %785 = vmatpush1.msra.mxu0 %v145
    %786 = vmatprep.subr.mxu0 0.0
    %787 = vmatpush1.msra.mxu0 %v146
    %788 = vmatprep.subr.mxu0 0.0
    %789 = vmatpush1.msra.mxu0 %v147
    %790 = vmatprep.subr.mxu0 0.0
    %791 = vmatpush1.msra.mxu0 %v148
    %792 = vmatprep.subr.mxu0 0.0
    %793 = vmatpush1.msra.mxu0 %v149
    %794 = vmatprep.subr.mxu0 0.0
    %795 = vmatpush1.msra.mxu0 %v150
    %796 = vmatprep.subr.mxu0 0.0
    %797 = vmatpush1.msra.mxu0 0.0
    %798 = vmatprep.subr.mxu0 0.0
    %799 = vmatpush1.msra.mxu0 0.0
    %800 = vmatprep.subr.mxu0 0.0
    %801 = vmatpush1.msra.mxu0 0.0
    %802 = vmatprep.subr.mxu0 0.0
    %803 = vmatpush1.msra.mxu0 0.0
    %804 = vmatprep.subr.mxu0 0.0
    %805 = vmatpush1.msra.mxu0 0.0
    %806 = vmatprep.subr.mxu0 0.0
    %807 = vmatpush1.msra.mxu0 0.0
    %808 = vmatprep.subr.mxu0 0.0
    %809 = vmatpush1.msra.mxu0 0.0
    %810 = vmatprep.subr.mxu0 0.0
    %811 = vmatpush1.msra.mxu0 0.0
    %812 = vmatprep.subr.mxu0 0.0
    %813 = vmatpush1.msra.mxu0 0.0
    %814 = vmatprep.subr.mxu0 0.0
    %815 = vmatpush1.msra.mxu0 0.0
    %816 = vmatprep.subr.mxu0 0.0
    %817 = vmatpush1.msra.mxu0 0.0
    %818 = vmatprep.subr.mxu0 0.0
    %819 = vmatpush1.msra.mxu0 0.0
    %820 = vmatprep.subr.mxu0 0.0
    %821 = vmatpush1.msra.mxu0 0.0
    %822 = vmatprep.subr.mxu0 0.0
    %823 = vmatpush1.msra.mxu0 0.0
    %824 = vmatprep.subr.mxu0 0.0
    %825 = vmatpush1.msra.mxu0 0.0
    %826 = vmatprep.subr.mxu0 0.0
    %827 = vmatpush1.msra.mxu0 0.0
    %828 = vmatprep.mubr.f32.mxu0 0.0
    %829 = vmatmul.mubr.f32.gmra.mrb[0].mxu0 %v762
    %v830 = vpop.f32.mrb[0].mxu0
    %v831 = vadd.f32 0.0, %v830
    %v832 = vpop.f32.mrb[0].mxu0
    %833 = vdwg.mxu0
    %v835 = vrot.slane %v831, 1
    %v838 = vadd.f32 %v757, %v831
    %v839 = vadd.f32 %v758, %v835
    %v840 = vtanh.pop %v838
    %v841 = vtanh.pop %v839
    %842 = vst [vmem:[#allocation3 + $0x7] sm:$0x1] %v840
    %843 = vst [vmem:[#allocation3 + $0xf] sm:$0x1] %v841
    %v846 = vrot.slane %v841, 7
    %v847 = vsel %vm239, %v846, %v840
    %849 = vst [vmem:[#allocation2] sm:$0x3] %v847
    // Predicated region
    $region30: #{tpu_custom_call.1} parent=1 // pred_check
      %p850 = pneg %p27
    $region31: #{tpu_custom_call.1} parent=1 // pred_check_branch
      %852 = sbr.rel (%p850) target = $region33
    $region32: #{tpu_custom_call.1} parent=1 // pred_region
      %v853 = vld [vmem:[#allocation2] sm:$0x3]
      %854 = vst [vmem:[#allocation6] sm:$0x3] %v853
    $region33: #{tpu_custom_call.1} parent=1 // pred_fallthru
      _
    %v855 = vld [vmem:[#allocation3] sm:$0xff]
    %v856 = vld [vmem:[#allocation3 + $0x8] sm:$0xff]
    %v857 = vld [vmem:[%s4] sm:$0xff]
    %v858 = vld [vmem:[%s4 + $0x8] sm:$0xff]
    %v859 = vld [vmem:[%s4 + $0x10] sm:$0xff]
    %v860 = vld [vmem:[%s4 + $0x18] sm:$0xff]
    %v861 = vld [vmem:[%s4 + $0x20] sm:$0xff]
    %v862 = vld [vmem:[%s4 + $0x28] sm:$0xff]
    %v863 = vld [vmem:[%s4 + $0x30] sm:$0xff]
    %v864 = vld [vmem:[%s4 + $0x38] sm:$0xff]
    %v865 = vld [vmem:[%s4 + $0x40] sm:$0xff]
    %v866 = vld [vmem:[%s4 + $0x48] sm:$0xff]
    %v867 = vld [vmem:[%s4 + $0x50] sm:$0xff]
    %v868 = vld [vmem:[%s4 + $0x58] sm:$0xff]
    %v869 = vld [vmem:[%s4 + $0x60] sm:$0xff]
    %v870 = vld [vmem:[%s4 + $0x68] sm:$0xff]
    %v871 = vld [vmem:[%s4 + $0x70] sm:$0xff]
    %v872 = vld [vmem:[%s4 + $0x78] sm:$0xff]
    %v873 = vld [vmem:[%s5] sm:$0x1]
    %v875 = vlaneseq
    %v876 = vshrl.u32 %v875, 7
    %v877 = vsub.s32 0, %v876
    %v878 = vrot.slane %v873, %v877
    %880 = vmatprep.subr.mxu0 0.0
    %881 = vmatpush1.msra.mxu0 %v857
    %882 = vmatprep.subr.mxu0 0.0
    %883 = vmatpush1.msra.mxu0 %v858
    %884 = vmatprep.subr.mxu0 0.0
    %885 = vmatpush1.msra.mxu0 %v859
    %886 = vmatprep.subr.mxu0 0.0
    %887 = vmatpush1.msra.mxu0 %v860
    %888 = vmatprep.subr.mxu0 0.0
    %889 = vmatpush1.msra.mxu0 %v861
    %890 = vmatprep.subr.mxu0 0.0
    %891 = vmatpush1.msra.mxu0 %v862
    %892 = vmatprep.subr.mxu0 0.0
    %893 = vmatpush1.msra.mxu0 %v863
    %894 = vmatprep.subr.mxu0 0.0
    %895 = vmatpush1.msra.mxu0 %v864
    %896 = vmatprep.subr.mxu0 0.0
    %897 = vmatpush1.msra.mxu0 %v865
    %898 = vmatprep.subr.mxu0 0.0
    %899 = vmatpush1.msra.mxu0 %v866
    %900 = vmatprep.subr.mxu0 0.0
    %901 = vmatpush1.msra.mxu0 %v867
    %902 = vmatprep.subr.mxu0 0.0
    %903 = vmatpush1.msra.mxu0 %v868
    %904 = vmatprep.subr.mxu0 0.0
    %905 = vmatpush1.msra.mxu0 %v869
    %906 = vmatprep.subr.mxu0 0.0
    %907 = vmatpush1.msra.mxu0 %v870
    %908 = vmatprep.subr.mxu0 0.0
    %909 = vmatpush1.msra.mxu0 %v871
    %910 = vmatprep.subr.mxu0 0.0
    %911 = vmatpush1.msra.mxu0 %v872
    %912 = vmatprep.subr.mxu0 0.0
    %913 = vmatpush1.msra.mxu0 0.0
    %914 = vmatprep.subr.mxu0 0.0
    %915 = vmatpush1.msra.mxu0 0.0
    %916 = vmatprep.subr.mxu0 0.0
    %917 = vmatpush1.msra.mxu0 0.0
    %918 = vmatprep.subr.mxu0 0.0
    %919 = vmatpush1.msra.mxu0 0.0
    %920 = vmatprep.subr.mxu0 0.0
    %921 = vmatpush1.msra.mxu0 0.0
    %922 = vmatprep.subr.mxu0 0.0
    %923 = vmatpush1.msra.mxu0 0.0
    %924 = vmatprep.subr.mxu0 0.0
    %925 = vmatpush1.msra.mxu0 0.0
    %926 = vmatprep.subr.mxu0 0.0
    %927 = vmatpush1.msra.mxu0 0.0
    %928 = vmatprep.subr.mxu0 0.0
    %929 = vmatpush1.msra.mxu0 0.0
    %930 = vmatprep.subr.mxu0 0.0
    %931 = vmatpush1.msra.mxu0 0.0
    %932 = vmatprep.subr.mxu0 0.0
    %933 = vmatpush1.msra.mxu0 0.0
    %934 = vmatprep.subr.mxu0 0.0
    %935 = vmatpush1.msra.mxu0 0.0
    %936 = vmatprep.subr.mxu0 0.0
    %937 = vmatpush1.msra.mxu0 0.0
    %938 = vmatprep.subr.mxu0 0.0
    %939 = vmatpush1.msra.mxu0 0.0
    %940 = vmatprep.subr.mxu0 0.0
    %941 = vmatpush1.msra.mxu0 0.0
    %942 = vmatprep.subr.mxu0 0.0
    %943 = vmatpush1.msra.mxu0 0.0
    %944 = vmatprep.mubr.f32.mxu0 0.0
    %945 = vmatmul.mubr.f32.gmra.mrb[0].mxu0 %v855
    %v946 = vpop.f32.mrb[0].mxu0
    %v947 = vadd.f32 %v878, %v946
    %v948 = vpop.f32.mrb[0].mxu0
    %949 = vmatprep.mubr.f32.mxu0 0.0
    %950 = vmatmul.mubr.f32.gmra.mrb[0].mxu0 %v856
    %v951 = vpop.f32.mrb[0].mxu0
    %v952 = vadd.f32 %v878, %v951
    %v953 = vpop.f32.mrb[0].mxu0
    %954 = vdwg.mxu0
    %955 = vst.msk [vmem:[#allocation4] sm:$0xff] %vm51, %v947
    %956 = vst.msk [vmem:[#allocation4 + $0x8] sm:$0xff] %vm51, %v952
    // Predicated region
    $region34: #{tpu_custom_call.1} parent=1 // pred_check
      _
    $region35: #{tpu_custom_call.1} parent=1 // pred_check_branch
      %958 = sbr.rel (0) target = $region37
    $region36: #{tpu_custom_call.1} parent=1 // pred_region
      %s960 = ssub.s32 256, 256
      %961 = vsyncadd [#allocation5], %s960
      %s962 = sshll.u32 [#allocation4], 4
      %s963 = int_to_ptr.vmem [resolvable:$true] %s962
      %968 = dma.vmem_to_hbm [thread:$0]  %s963, 256, %s6, [#allocation5], 128, 128, 8
    $region37: #{tpu_custom_call.1} parent=1 // pred_fallthru
      _
    // Predicated region
    $region38: #{tpu_custom_call.1} parent=1 // pred_check
      _
    $region39: #{tpu_custom_call.1} parent=1 // pred_check_branch
      %970 = sbr.rel (0) target = $region41
    $region40: #{tpu_custom_call.1} parent=1 // pred_region
      %s972 = ssub.s32 32, 32
      %973 = vsyncadd [#allocation7], %s972
      %s975 = sshll.u32 [#allocation6], 4
      %s976 = int_to_ptr.vmem [resolvable:$true] %s975
      %978 = dma.vmem_to_hbm [thread:$0]  %s976, 32, %s7, [#allocation7]
    $region41: #{tpu_custom_call.1} parent=1 // pred_fallthru
      _
    // Predicated region
    $region42: #{tpu_custom_call.1} parent=1 // pred_check
      _
    $region43: #{tpu_custom_call.1} parent=1 // pred_check_branch
      %980 = sbr.rel (0) target = $region45
    $region44: #{tpu_custom_call.1} parent=1 // pred_region
      %981 = dma.done [#allocation5], 256
    $region45: #{tpu_custom_call.1} parent=1 // pred_fallthru
      _
    // Predicated region
    $region46: #{tpu_custom_call.1} parent=1 // pred_check
      _
    $region47: #{tpu_custom_call.1} parent=1 // pred_check_branch
      %983 = sbr.rel (0) target = $region49
    $region48: #{tpu_custom_call.1} parent=1 // pred_region
      %984 = dma.done [#allocation7], 32
    $region49: #{tpu_custom_call.1} parent=1 // pred_fallthru
      _
    %985 = vsyncpa [#allocation5], 1
    %986 = vsyncpa [#allocation7], 1

</llo_original>
